<compile_context>
chip_gen: v5e
topology: v5e:2x2
jax: 0.10.0
libtpu: 0.0.40
codegen_flags: <defaults>
</compile_context>

<pallas_src>
import functools

import jax
import jax.numpy as jnp
from jax.experimental import pallas as pl
from jax.experimental.pallas import tpu as pltpu  # noqa: F401  (TPU backend)


# ----------------------------------------------------------------------------
# Pallas kernel: full DecoderRNN forward in a single invocation.
# ----------------------------------------------------------------------------
def _decoder_rnn_kernel(x_ref, h0_ref, w_ref, wp_ref, b_ref, out_ref,
                        *, T, B, IN, H, P):
    """Refs:
      x_ref  : (T*B, IN)      time-major flattened input (MXU dtype)
      h0_ref : (B, H)         initial hidden state (f32)
      w_ref  : (H+IN, H)      rows [0:H] = W_hh^T, rows [H:H+IN] = W_ih^T
      wp_ref : (T*H, T*P)     block-diagonal W_p^T (one MXU pass -> final layout)
      b_ref  : (1, H + T*P)   [:, :H] = b_ih+b_hh (folded), [:, H:] = tile(b_p, T)
      out_ref: (B, T*P + H)   [:, :T*P] = de_pred, [:, T*P:] = h_T
    """
    mxu_dt = w_ref.dtype
    whh = w_ref[:H, :]                                   # (H, H)   W_hh^T
    wih = w_ref[H:, :]                                   # (IN, H)  W_ih^T
    b_h = b_ref[:, :H]                                   # (1, H)   folded RNN bias
    b_p = b_ref[:, H:]                                   # (1, T*P) tiled patch bias

    # Hoisted input projection for ALL timesteps: one MXU pass, bias added once.
    x_proj = (jnp.dot(x_ref[...], wih, preferred_element_type=jnp.float32)
              + b_h)                                     # (T*B, H) f32

    # Serial recurrence: only h_{t-1} @ W_hh^T + tanh stays on the chain.
    # T is small and static -> fully unrolled with sublane-aligned row slices.
    h = h0_ref[...]                                      # (B, H) f32 loop-carried
    hs = []
    for t in range(T):
        h = jnp.tanh(x_proj[t * B:(t + 1) * B, :]
                     + jnp.dot(h.astype(mxu_dt), whh,
                               preferred_element_type=jnp.float32))
        hs.append(h)

    # Hoisted output projection: (B, T*H) @ block-diag (T*H, T*P) -> (B, T*P),
    # already in the final de_pred layout; single ReLU; single full-width store
    # with h_T folded into the same output buffer (one writeback descriptor).
    h_cat = jnp.concatenate(hs, axis=1).astype(mxu_dt)   # (B, T*H)
    pred = (jnp.dot(h_cat, wp_ref[...], preferred_element_type=jnp.float32)
            + b_p)                                       # (B, T*P) f32
    out_ref[...] = jnp.concatenate([jnp.maximum(pred, 0.0), h], axis=1)


# ----------------------------------------------------------------------------
# One-time parameter preparation (NOT on the per-call hot path).
# ----------------------------------------------------------------------------
def prepare_params(params, T, mxu_dtype=jnp.bfloat16):
    """Fold / transpose / stack the weights once, at parameter-load time."""
    W_ih, W_hh, b_ih, b_hh, W_p, b_p = params
    H, IN = W_ih.shape
    P = W_p.shape[0]

    # W_hh^T first so both sub-slices start on a 16-sublane boundary (bf16).
    w_cat = jnp.concatenate([W_hh.T, W_ih.T], axis=0).astype(mxu_dtype)   # (H+IN, H)
    # Block-diagonal patch weight -> one K = T*H MXU pass, lane-dense output.
    wp_bd = jax.scipy.linalg.block_diag(*([W_p.T] * T)).astype(mxu_dtype)  # (T*H, T*P)
    # Folded RNN bias and tiled patch bias in one descriptor (kept f32).
    b_cat = jnp.concatenate(
        [(b_ih + b_hh).reshape(1, H), jnp.tile(b_p, T).reshape(1, T * P)],
        axis=1).astype(jnp.float32)                                        # (1, H+T*P)
    return (w_cat, wp_bd, b_cat)


# ----------------------------------------------------------------------------
# Per-call wrapper: only activation layout prep (permute + batch pad), jitted.
# ----------------------------------------------------------------------------
@jax.jit
def decoder_rnn_forward(inp, hidden_state, prep):
    """inp (B, seq_len, a) f32, hidden_state (1, B, d_model) f32.
    Returns (de_pred (B, a*patch_len), hid (1, B, d_model))."""
    w_cat, wp_bd, b_cat = prep
    B, L, a = inp.shape
    T, IN = a, L
    H = w_cat.shape[1]
    P = wp_bd.shape[1] // T
    mxu_dtype = w_cat.dtype

    # Pad batch to the f32 sublane tile so per-step row slices are aligned.
    SUB = 8
    Bp = ((B + SUB - 1) // SUB) * SUB

    # (B, L, a) -> time-major (T, B, IN) -> zero-pad batch -> (T*Bp, IN).
    x_tm = jnp.transpose(inp, (2, 0, 1)).astype(mxu_dtype)
    x_tm = jnp.pad(x_tm, ((0, 0), (0, Bp - B), (0, 0)))
    x_flat = x_tm.reshape(T * Bp, IN)

    h0 = jnp.pad(hidden_state[0].astype(jnp.float32), ((0, Bp - B), (0, 0)))

    kernel = functools.partial(_decoder_rnn_kernel, T=T, B=Bp, IN=IN, H=H, P=P)
    out = pl.pallas_call(
        kernel,
        out_shape=jax.ShapeDtypeStruct((Bp, T * P + H), jnp.float32),
    )(x_flat, h0, w_cat, wp_bd, b_cat)

    de_pred = out[:B, :T * P]
    hN = out[:B, T * P:]
    return de_pred, hN[None]


# ----------------------------------------------------------------------------
# Pure-JAX reference (mirrors torch.nn.RNN with tanh nonlinearity).
# ----------------------------------------------------------------------------
def reference_forward(inp, hidden_state, params):
    W_ih, W_hh, b_ih, b_hh, W_p, b_p = params
    B = inp.shape[0]
    x_tm = jnp.transpose(inp, (2, 0, 1))                 # (T, B, IN)

    def step(h, x_t):
        h = jnp.tanh(x_t @ W_ih.T + b_ih + h @ W_hh.T + b_hh)
        return h, h

    hN, hs = jax.lax.scan(step, hidden_state[0], x_tm)
    dec_out = jnp.transpose(hs, (1, 0, 2))               # (B, T, H)
    de_pred = jax.nn.relu((dec_out @ W_p.T + b_p).reshape(B, -1))
    return de_pred, hN[None]


# ----------------------------------------------------------------------------
# Main
# ----------------------------------------------------------------------------
if __name__ == "__main__":
    # configs
    B = 2
    seq_len = 8       # RNN input_size (feature dim after permute)
    d_model = 32      # RNN hidden size
    patch_len = 16    # de_pred_len
    a = 4             # decoder sequence length (time steps)

    key = jax.random.PRNGKey(0)
    k_in, k_h, k1, k2, k3, k4, k5, k6 = jax.random.split(key, 8)

    # Deterministic parameter init (PyTorch-style uniform +/- 1/sqrt(hidden)).
    bound = 1.0 / (d_model ** 0.5)
    W_ih = jax.random.uniform(k1, (d_model, seq_len), jnp.float32, -bound, bound)
    W_hh = jax.random.uniform(k2, (d_model, d_model), jnp.float32, -bound, bound)
    b_ih = jax.random.uniform(k3, (d_model,), jnp.float32, -bound, bound)
    b_hh = jax.random.uniform(k4, (d_model,), jnp.float32, -bound, bound)
    W_p = jax.random.uniform(k5, (patch_len, d_model), jnp.float32, -bound, bound)
    b_p = jax.random.uniform(k6, (patch_len,), jnp.float32, -bound, bound)
    params = (W_ih, W_hh, b_ih, b_hh, W_p, b_p)

    # Inputs: input (B, seq_len, a), hidden_state (1, B, d_model)
    x = jax.random.normal(k_in, (B, seq_len, a), jnp.float32)
    h0 = jax.random.normal(k_h, (1, B, d_model), jnp.float32)

    de_ref, hid_ref = reference_forward(x, h0, params)

    # --- f32 MXU-operand variant (tight check) --------------------------------
    prep_f32 = prepare_params(params, T=a, mxu_dtype=jnp.float32)
    de_pred, hid = decoder_rnn_forward(x, h0, prep_f32)
    jax.block_until_ready((de_pred, hid))
    assert de_pred.shape == (B, a * patch_len)
    assert hid.shape == (1, B, d_model)
    assert jnp.allclose(de_pred, de_ref, atol=1e-4, rtol=1e-4)
    assert jnp.allclose(hid, hid_ref, atol=1e-4, rtol=1e-4)

    # --- bf16 MXU-operand variant (v6e/v7x single-pass MXU path) --------------
    # bf16 operand rounding, f32 accumulation -> looser tolerance.
    prep_bf16 = prepare_params(params, T=a, mxu_dtype=jnp.bfloat16)
    de_pred_b, hid_b = decoder_rnn_forward(x, h0, prep_bf16)
    jax.block_until_ready((de_pred_b, hid_b))
    assert de_pred_b.shape == (B, a * patch_len)
    assert hid_b.shape == (1, B, d_model)
    assert jnp.allclose(de_pred_b, de_ref, atol=2e-2, rtol=2e-2)
    assert jnp.allclose(hid_b, hid_ref, atol=2e-2, rtol=2e-2)

    print("KERNEL_OK")
</pallas_src>

<mosaic_0001>
module attributes {stable_mosaic.version = 11 : i64} {
  func.func @_decoder_rnn_kernel(%arg0: memref<32x8xf32, #tpu.memory_space<vmem>>, %arg1: memref<8x32xf32, #tpu.memory_space<vmem>>, %arg2: memref<40x32xf32, #tpu.memory_space<vmem>>, %arg3: memref<128x64xf32, #tpu.memory_space<vmem>>, %arg4: memref<1x96xf32, #tpu.memory_space<vmem>>, %arg5: memref<8x96xf32, #tpu.memory_space<vmem>>) attributes {dimension_semantics = [], scalar_prefetch = 0 : i64, scratch_operands = 0 : i64, tpu.core_type = #tpu.core_type<tc>} {
    %c0 = arith.constant 0 : index
    %c0_0 = arith.constant 0 : index
    %0 = vector.load %arg2[%c0, %c0_0] : memref<40x32xf32, #tpu.memory_space<vmem>>, vector<32x32xf32>
    %c32 = arith.constant 32 : index
    %c0_1 = arith.constant 0 : index
    %1 = vector.load %arg2[%c32, %c0_1] : memref<40x32xf32, #tpu.memory_space<vmem>>, vector<8x32xf32>
    %c0_2 = arith.constant 0 : index
    %c0_3 = arith.constant 0 : index
    %2 = vector.load %arg4[%c0_2, %c0_3] : memref<1x96xf32, #tpu.memory_space<vmem>>, vector<1x32xf32>
    %c0_4 = arith.constant 0 : index
    %c32_5 = arith.constant 32 : index
    %3 = vector.load %arg4[%c0_4, %c32_5] : memref<1x96xf32, #tpu.memory_space<vmem>>, vector<1x64xf32>
    %c0_6 = arith.constant 0 : index
    %c0_7 = arith.constant 0 : index
    %4 = vector.load %arg0[%c0_6, %c0_7] : memref<32x8xf32, #tpu.memory_space<vmem>>, vector<32x8xf32>
    %cst = arith.constant dense<0.000000e+00> : vector<32x32xf32>
    %5 = tpu.matmul %4, %1, %cst {dimension_numbers = #tpu.dot_dimension_numbers<[1], [0], [0], [1], [0, 0, 1, 1], [], []>} : vector<32x8xf32>, vector<8x32xf32>, vector<32x32xf32> -> vector<32x32xf32>
    %6 = vector.broadcast %2 : vector<1x32xf32> to vector<32x32xf32>
    %7 = arith.addf %5, %6 : vector<32x32xf32>
    %c0_8 = arith.constant 0 : index
    %c0_9 = arith.constant 0 : index
    %8 = vector.load %arg1[%c0_8, %c0_9] : memref<8x32xf32, #tpu.memory_space<vmem>>, vector<8x32xf32>
    %9 = vector.extract_strided_slice %7 {offsets = [0, 0], sizes = [8, 32], strides = [1, 1]} : vector<32x32xf32> to vector<8x32xf32>
    %cst_10 = arith.constant dense<0.000000e+00> : vector<8x32xf32>
    %10 = tpu.matmul %8, %0, %cst_10 {dimension_numbers = #tpu.dot_dimension_numbers<[1], [0], [0], [1], [0, 0, 1, 1], [], []>} : vector<8x32xf32>, vector<32x32xf32>, vector<8x32xf32> -> vector<8x32xf32>
    %11 = arith.addf %9, %10 : vector<8x32xf32>
    %12 = math.tanh %11 : vector<8x32xf32>
    %13 = vector.extract_strided_slice %7 {offsets = [8, 0], sizes = [8, 32], strides = [1, 1]} : vector<32x32xf32> to vector<8x32xf32>
    %cst_11 = arith.constant dense<0.000000e+00> : vector<8x32xf32>
    %14 = tpu.matmul %12, %0, %cst_11 {dimension_numbers = #tpu.dot_dimension_numbers<[1], [0], [0], [1], [0, 0, 1, 1], [], []>} : vector<8x32xf32>, vector<32x32xf32>, vector<8x32xf32> -> vector<8x32xf32>
    %15 = arith.addf %13, %14 : vector<8x32xf32>
    %16 = math.tanh %15 : vector<8x32xf32>
    %17 = vector.extract_strided_slice %7 {offsets = [16, 0], sizes = [8, 32], strides = [1, 1]} : vector<32x32xf32> to vector<8x32xf32>
    %cst_12 = arith.constant dense<0.000000e+00> : vector<8x32xf32>
    %18 = tpu.matmul %16, %0, %cst_12 {dimension_numbers = #tpu.dot_dimension_numbers<[1], [0], [0], [1], [0, 0, 1, 1], [], []>} : vector<8x32xf32>, vector<32x32xf32>, vector<8x32xf32> -> vector<8x32xf32>
    %19 = arith.addf %17, %18 : vector<8x32xf32>
    %20 = math.tanh %19 : vector<8x32xf32>
    %21 = vector.extract_strided_slice %7 {offsets = [24, 0], sizes = [8, 32], strides = [1, 1]} : vector<32x32xf32> to vector<8x32xf32>
    %cst_13 = arith.constant dense<0.000000e+00> : vector<8x32xf32>
    %22 = tpu.matmul %20, %0, %cst_13 {dimension_numbers = #tpu.dot_dimension_numbers<[1], [0], [0], [1], [0, 0, 1, 1], [], []>} : vector<8x32xf32>, vector<32x32xf32>, vector<8x32xf32> -> vector<8x32xf32>
    %23 = arith.addf %21, %22 : vector<8x32xf32>
    %24 = math.tanh %23 : vector<8x32xf32>
    %25 = tpu.concatenate %12, %16, %20, %24 in 1 : vector<8x32xf32>, vector<8x32xf32>, vector<8x32xf32>, vector<8x32xf32> -> vector<8x128xf32>
    %c0_14 = arith.constant 0 : index
    %c0_15 = arith.constant 0 : index
    %26 = vector.load %arg3[%c0_14, %c0_15] : memref<128x64xf32, #tpu.memory_space<vmem>>, vector<128x64xf32>
    %cst_16 = arith.constant dense<0.000000e+00> : vector<8x64xf32>
    %27 = tpu.matmul %25, %26, %cst_16 {dimension_numbers = #tpu.dot_dimension_numbers<[1], [0], [0], [1], [0, 0, 1, 1], [], []>} : vector<8x128xf32>, vector<128x64xf32>, vector<8x64xf32> -> vector<8x64xf32>
    %28 = vector.broadcast %3 : vector<1x64xf32> to vector<8x64xf32>
    %29 = arith.addf %27, %28 : vector<8x64xf32>
    %cst_17 = arith.constant 0.000000e+00 : f32
    %30 = vector.broadcast %cst_17 : f32 to vector<8x64xf32>
    %31 = arith.maximumf %29, %30 : vector<8x64xf32>
    %32 = tpu.concatenate %31, %24 in 1 : vector<8x64xf32>, vector<8x32xf32> -> vector<8x96xf32>
    %c0_18 = arith.constant 0 : index
    %c0_19 = arith.constant 0 : index
    %33 = vector.load %arg5[%c0_18, %c0_19] : memref<8x96xf32, #tpu.memory_space<vmem>>, vector<8x96xf32>
    tpu.vector_store %arg5[%c0_18, %c0_19], %32 {strides = array<i32>} : memref<8x96xf32, #tpu.memory_space<vmem>>, vector<8x96xf32>,
    return
  }
}

</mosaic_0001>

<llo_original>
// kernel: decoder_rnn_forward.1
$region0: #{decoder_rnn_forward.1}
  #allocation0 [shape = 'u32[]', space=smem, size = 0x4, offset = 0x4, fixed_abs, tag = 'smem constant byte address 0x4 - core index']
  #allocation1 [shape = 'u32[72,128]{1,0:T(1,128)}', space=vmem, size = 0x9000, scoped, tag = 'internal scratch']
  %s0 = inlined_call_operand.vmem [shape: f32[32,8], index: 0, kind: input, shape index: {}]
  %s1 = inlined_call_operand.vmem [shape: f32[8,32], index: 1, kind: input, shape index: {}]
  %s2 = inlined_call_operand.vmem [shape: f32[40,32], index: 2, kind: input, shape index: {}]
  %s3 = inlined_call_operand.vmem [shape: f32[128,64], index: 3, kind: input, shape index: {}]
  %s4 = inlined_call_operand.vmem [shape: f32[1,96], index: 4, kind: input, shape index: {}]
  %s5 = inlined_call_operand.vmem [shape: f32[8,96], index: 5, kind: output, shape index: {}]
  %s6 = sld [smem:[#allocation0]]
  $region30: #{decoder_rnn_forward.1} parent=0
    _
  %s8 = ssub.s32 1, %s6
  %s9 = scalar_select 0, %s8, %s6
  // Predicated region
  $region2: #{decoder_rnn_forward.1} parent=0 // pred_check
    _
  $region3: #{decoder_rnn_forward.1} parent=0 // pred_check_branch
    %11 = sbr.rel (0) target = $region5
  $region4: #{decoder_rnn_forward.1} parent=0 // pred_region
    _
  $region5: #{decoder_rnn_forward.1} parent=0 // pred_fallthru
    _
  // Predicated region
  $region6: #{decoder_rnn_forward.1} parent=0 // pred_check
    _
  $region7: #{decoder_rnn_forward.1} parent=0 // pred_check_branch
    %13 = sbr.rel (0) target = $region9
  $region8: #{decoder_rnn_forward.1} parent=0 // pred_region
    _
  $region9: #{decoder_rnn_forward.1} parent=0 // pred_fallthru
    _
  // Predicated region
  $region10: #{decoder_rnn_forward.1} parent=0 // pred_check
    _
  $region11: #{decoder_rnn_forward.1} parent=0 // pred_check_branch
    %15 = sbr.rel (0) target = $region13
  $region12: #{decoder_rnn_forward.1} parent=0 // pred_region
    _
  $region13: #{decoder_rnn_forward.1} parent=0 // pred_fallthru
    _
  // Predicated region
  $region14: #{decoder_rnn_forward.1} parent=0 // pred_check
    _
  $region15: #{decoder_rnn_forward.1} parent=0 // pred_check_branch
    %17 = sbr.rel (0) target = $region17
  $region16: #{decoder_rnn_forward.1} parent=0 // pred_region
    _
  $region17: #{decoder_rnn_forward.1} parent=0 // pred_fallthru
    _
  // Predicated region
  $region18: #{decoder_rnn_forward.1} parent=0 // pred_check
    _
  $region19: #{decoder_rnn_forward.1} parent=0 // pred_check_branch
    %19 = sbr.rel (0) target = $region21
  $region20: #{decoder_rnn_forward.1} parent=0 // pred_region
    _
  $region21: #{decoder_rnn_forward.1} parent=0 // pred_fallthru
    _
  %v20 = vld [vmem:[%s2] sm:$0xff]
  %v21 = vld [vmem:[%s2 + $0x8] sm:$0xff]
  %v22 = vld [vmem:[%s2 + $0x10] sm:$0xff]
  %v23 = vld [vmem:[%s2 + $0x18] sm:$0xff]
  %v24 = vld [vmem:[%s2 + $0x20] sm:$0xff]
  %v25 = vld [vmem:[%s4] sm:$0x1]
  %v26 = vld [vmem:[%s0] sm:$0xff]
  %v27 = vld [vmem:[%s0 + $0x8] sm:$0xff]
  %v28 = vld [vmem:[%s0 + $0x10] sm:$0xff]
  %v29 = vld [vmem:[%s0 + $0x18] sm:$0xff]
  %v31 = vperm.slane %v25, 0
  %vm33 = vcmask 64512
  %v35 = vsel %vm33, %v26, 0
  %v38 = vsel %vm33, %v27, 0
  %v41 = vsel %vm33, %v28, 0
  %v44 = vsel %vm33, %v29, 0
  %46 = vmatpush.msra.mxu0 0.0
  %47 = vmatpush.msra.mxu0 0.0
  %48 = vmatpush.msra.mxu0 0.0
  %49 = vmatpush.msra.mxu0 0.0
  %50 = vmatpush.msra.mxu0 0.0
  %51 = vmatpush.msra.mxu0 0.0
  %52 = vmatpush.msra.mxu0 0.0
  %53 = vmatpush.msra.mxu0 0.0
  %54 = vmatpush.msra.mxu0 0.0
  %55 = vmatpush.msra.mxu0 0.0
  %56 = vmatpush.msra.mxu0 0.0
  %57 = vmatpush.msra.mxu0 0.0
  %58 = vmatpush.msra.mxu0 0.0
  %59 = vmatpush.msra.mxu0 0.0
  %60 = vmatpush.msra.mxu0 0.0
  %61 = vmatpush.msra.mxu0 %v24
  %62 = vmatmul.f32.gmra.mxu0 %v35
  %v63 = vpop.f32.mrf.mxu0
  %v64 = vadd.f32 %v31, %v63
  %65 = vmatmul.f32.gmra.mxu0 %v38
  %v66 = vpop.f32.mrf.mxu0
  %v67 = vadd.f32 %v31, %v66
  %68 = vmatmul.f32.gmra.mxu0 %v41
  %v69 = vpop.f32.mrf.mxu0
  %v70 = vadd.f32 %v31, %v69
  %71 = vmatmul.f32.gmra.mxu0 %v44
  %v72 = vpop.f32.mrf.mxu0
  %v73 = vadd.f32 %v31, %v72
  %74 = vdwg.mxu0
  %v75 = vld [vmem:[%s1] sm:$0xff]
  %vm76 = vcmask 261120
  %v78 = vsel %vm76, %v75, 0
  %80 = vmatpush.msra.mxu0 0.0
  %81 = vmatpush.msra.mxu0 0.0
  %82 = vmatpush.msra.mxu0 0.0
  %83 = vmatpush.msra.mxu0 0.0
  %84 = vmatpush.msra.mxu0 0.0
  %85 = vmatpush.msra.mxu0 0.0
  %86 = vmatpush.msra.mxu0 0.0
  %87 = vmatpush.msra.mxu0 0.0
  %88 = vmatpush.msra.mxu0 0.0
  %89 = vmatpush.msra.mxu0 0.0
  %90 = vmatpush.msra.mxu0 0.0
  %91 = vmatpush.msra.mxu0 0.0
  %92 = vmatpush.msra.mxu0 %v23
  %93 = vmatpush.msra.mxu0 %v22
  %94 = vmatpush.msra.mxu0 %v21
  %95 = vmatpush.msra.mxu0 %v20
  %96 = vmatmul.f32.gmra.mxu0 %v78
  %v97 = vpop.f32.mrf.mxu0
  %v98 = vadd.f32 0.0, %v97
  %99 = vdwg.mxu0
  %v100 = vadd.f32 %v64, %v98
  %v101 = vtanh.pop %v100
  %v103 = vsel %vm76, %v101, 0
  %105 = vmatpush.msra.mxu0 0.0
  %106 = vmatpush.msra.mxu0 0.0
  %107 = vmatpush.msra.mxu0 0.0
  %108 = vmatpush.msra.mxu0 0.0
  %109 = vmatpush.msra.mxu0 0.0
  %110 = vmatpush.msra.mxu0 0.0
  %111 = vmatpush.msra.mxu0 0.0
  %112 = vmatpush.msra.mxu0 0.0
  %113 = vmatpush.msra.mxu0 0.0
  %114 = vmatpush.msra.mxu0 0.0
  %115 = vmatpush.msra.mxu0 0.0
  %116 = vmatpush.msra.mxu0 0.0
  %117 = vmatpush.msra.mxu0 %v23
  %118 = vmatpush.msra.mxu0 %v22
  %119 = vmatpush.msra.mxu0 %v21
  %120 = vmatpush.msra.mxu0 %v20
  %121 = vmatmul.f32.gmra.mxu0 %v103
  %v122 = vpop.f32.mrf.mxu0
  %v123 = vadd.f32 0.0, %v122
  %124 = vdwg.mxu0
  %v125 = vadd.f32 %v67, %v123
  %v126 = vtanh.pop %v125
  %v128 = vsel %vm76, %v126, 0
  %130 = vmatpush.msra.mxu0 0.0
  %131 = vmatpush.msra.mxu0 0.0
  %132 = vmatpush.msra.mxu0 0.0
  %133 = vmatpush.msra.mxu0 0.0
  %134 = vmatpush.msra.mxu0 0.0
  %135 = vmatpush.msra.mxu0 0.0
  %136 = vmatpush.msra.mxu0 0.0
  %137 = vmatpush.msra.mxu0 0.0
  %138 = vmatpush.msra.mxu0 0.0
  %139 = vmatpush.msra.mxu0 0.0
  %140 = vmatpush.msra.mxu0 0.0
  %141 = vmatpush.msra.mxu0 0.0
  %142 = vmatpush.msra.mxu0 %v23
  %143 = vmatpush.msra.mxu0 %v22
  %144 = vmatpush.msra.mxu0 %v21
  %145 = vmatpush.msra.mxu0 %v20
  %146 = vmatmul.f32.gmra.mxu0 %v128
  %v147 = vpop.f32.mrf.mxu0
  %v148 = vadd.f32 0.0, %v147
  %149 = vdwg.mxu0
  %v150 = vadd.f32 %v70, %v148
  %v151 = vtanh.pop %v150
  %v153 = vsel %vm76, %v151, 0
  %155 = vmatpush.msra.mxu0 0.0
  %156 = vmatpush.msra.mxu0 0.0
  %157 = vmatpush.msra.mxu0 0.0
  %158 = vmatpush.msra.mxu0 0.0
  %159 = vmatpush.msra.mxu0 0.0
  %160 = vmatpush.msra.mxu0 0.0
  %161 = vmatpush.msra.mxu0 0.0
  %162 = vmatpush.msra.mxu0 0.0
  %163 = vmatpush.msra.mxu0 0.0
  %164 = vmatpush.msra.mxu0 0.0
  %165 = vmatpush.msra.mxu0 0.0
  %166 = vmatpush.msra.mxu0 0.0
  %167 = vmatpush.msra.mxu0 %v23
  %168 = vmatpush.msra.mxu0 %v22
  %169 = vmatpush.msra.mxu0 %v21
  %170 = vmatpush.msra.mxu0 %v20
  %171 = vmatmul.f32.gmra.mxu0 %v153
  %v172 = vpop.f32.mrf.mxu0
  %v173 = vadd.f32 0.0, %v172
  %174 = vdwg.mxu0
  %v175 = vadd.f32 %v73, %v173
  %v176 = vtanh.pop %v175
  %177 = vrot.lane.b32.xlu0 %v126, 32
  %v178 = vpop.permute.xlu0 %177
  %180 = vrot.lane.b32.xlu0 %v151, 64
  %v181 = vpop.permute.xlu0 %180
  %184 = vrot.lane.b32.xlu0 %v176, 96
  %v185 = vpop.permute.xlu0 %184
  %v187 = vsel %vm76, %v101, %v178
  %vm188 = vcmask 523264
  %v189 = vsel %vm188, %v187, %v181
  %vm190 = vcmask 785408
  %v191 = vsel %vm190, %v189, %v185
  %v192 = vld [vmem:[%s3] sm:$0xff]
  %v193 = vld [vmem:[%s3 + $0x8] sm:$0xff]
  %v194 = vld [vmem:[%s3 + $0x10] sm:$0xff]
  %v195 = vld [vmem:[%s3 + $0x18] sm:$0xff]
  %v196 = vld [vmem:[%s3 + $0x20] sm:$0xff]
  %v197 = vld [vmem:[%s3 + $0x28] sm:$0xff]
  %v198 = vld [vmem:[%s3 + $0x30] sm:$0xff]
  %v199 = vld [vmem:[%s3 + $0x38] sm:$0xff]
  %v200 = vld [vmem:[%s3 + $0x40] sm:$0xff]
  %v201 = vld [vmem:[%s3 + $0x48] sm:$0xff]
  %v202 = vld [vmem:[%s3 + $0x50] sm:$0xff]
  %v203 = vld [vmem:[%s3 + $0x58] sm:$0xff]
  %v204 = vld [vmem:[%s3 + $0x60] sm:$0xff]
  %v205 = vld [vmem:[%s3 + $0x68] sm:$0xff]
  %v206 = vld [vmem:[%s3 + $0x70] sm:$0xff]
  %v207 = vld [vmem:[%s3 + $0x78] sm:$0xff]
  %208 = vrot.lane.b32.xlu0 %v31, 96
  %v209 = vpop.permute.xlu0 %208
  %211 = vmatpush.msra.mxu0 %v207
  %212 = vmatpush.msra.mxu0 %v206
  %213 = vmatpush.msra.mxu0 %v205
  %214 = vmatpush.msra.mxu0 %v204
  %215 = vmatpush.msra.mxu0 %v203
  %216 = vmatpush.msra.mxu0 %v202
  %217 = vmatpush.msra.mxu0 %v201
  %218 = vmatpush.msra.mxu0 %v200
  %219 = vmatpush.msra.mxu0 %v199
  %220 = vmatpush.msra.mxu0 %v198
  %221 = vmatpush.msra.mxu0 %v197
  %222 = vmatpush.msra.mxu0 %v196
  %223 = vmatpush.msra.mxu0 %v195
  %224 = vmatpush.msra.mxu0 %v194
  %225 = vmatpush.msra.mxu0 %v193
  %226 = vmatpush.msra.mxu0 %v192
  %227 = vmatmul.f32.gmra.mxu0 %v191
  %v228 = vpop.f32.mrf.mxu0
  %v229 = vadd.f32 %v209, %v228
  %230 = vdwg.mxu0
  %v231 = vmax.f32 %v229, 0.0
  %232 = vrot.lane.b32.xlu0 %v176, 64
  %v233 = vpop.permute.xlu0 %232
  %v235 = vsel %vm188, %v231, %v233
  %236 = vst.msk [vmem:[%s5] sm:$0xff] %vm190, %v235
  // Predicated region
  $region22: #{decoder_rnn_forward.1} parent=0 // pred_check
    _
  $region23: #{decoder_rnn_forward.1} parent=0 // pred_check_branch
    %238 = sbr.rel (0) target = $region25
  $region24: #{decoder_rnn_forward.1} parent=0 // pred_region
    _
  $region25: #{decoder_rnn_forward.1} parent=0 // pred_fallthru
    _
  // Predicated region
  $region26: #{decoder_rnn_forward.1} parent=0 // pred_check
    _
  $region27: #{decoder_rnn_forward.1} parent=0 // pred_check_branch
    %240 = sbr.rel (0) target = $region29
  $region28: #{decoder_rnn_forward.1} parent=0 // pred_region
    _
  $region29: #{decoder_rnn_forward.1} parent=0 // pred_fallthru
    _

</llo_original>
